<compile_context>
chip_gen: v7x
topology: tpu7x:2x2x1
jax: 0.10.0
libtpu: 0.0.40
codegen_flags: <defaults>
</compile_context>

<pallas_src>
import functools

import jax
import jax.numpy as jnp
from jax import lax
from jax.experimental import pallas as pl
from jax.experimental.pallas import tpu as pltpu


# Double-buffered byte budget for the streamed x tiles (~8 MiB total keeps each
# per-(n, c) contiguous DMA chunk large while fitting every generation's scoped
# VMEM: v5e 16 MiB default, v6e 32 MiB, v7x 64 MiB physical).
_X_TILE_BUDGET_BYTES = 8 * 1024 * 1024
_VMEM_LIMIT_BYTES = 32 * 1024 * 1024


def _round_up(x, m):
    return ((x + m - 1) // m) * m


def _choose_hw_tile(hw, c, itemsize):
    """Pick (t_hw, hw_padded): t_hw is a multiple of 128 sized from the VMEM budget."""
    max_t = max(128, (_X_TILE_BUDGET_BYTES // (2 * c * itemsize)) // 128 * 128)
    hw128 = _round_up(hw, 128)
    if hw128 <= max_t:
        return hw128, hw128
    # Prefer the largest 128-multiple divisor of hw128 within budget (no extra pad).
    best = 128
    for t in range(max_t, 127, -128):
        if hw128 % t == 0:
            best = t
            break
    if best * 2 >= max_t:
        return best, hw128
    # All divisors are small: pad HW up to a multiple of the budget tile instead.
    return max_t, _round_up(hw128, max_t)


# ---------------------------------------------------------------------------
# Pallas kernel: fused global-avg-pool + bottleneck MLP + sigmoid
# ---------------------------------------------------------------------------
def _gap_kernel(x_ref, w1_ref, b1_ref, w2_ref, b2_ref, o_ref, acc_ref,
                *, inv_hw, lane_chunks):
    """x_ref: (1, C, t_hw) tile of one image; acc_ref: (C, 128) partial sums."""
    k = pl.program_id(1)

    @pl.when(k == 0)
    def _():
        acc_ref[...] = jnp.zeros_like(acc_ref)

    # Lane-preserving partial pooling: accumulate 128-wide lane chunks so the
    # steady-state loop is pure full-width VPU adds (no per-step cross-lane
    # reduce, no narrow masked stores).  Per-chunk loads keep VMEM pressure low.
    def body(i, carry):
        start = pl.multiple_of(i * 128, 128)
        return carry + x_ref[0, :, pl.ds(start, 128)].astype(jnp.float32)

    acc_ref[...] += lax.fori_loop(0, lane_chunks, body,
                                  jnp.zeros(acc_ref.shape, jnp.float32))

    @pl.when(k == pl.num_programs(1) - 1)
    def _():
        # Single cross-lane reduce; padded lanes contributed zeros, divide by true HW.
        pooled = jnp.sum(acc_ref[...], axis=1, keepdims=True) * inv_hw       # (C, 1)
        # 1x1 conv + folded BN -> ReLU (column orientation: no transposes needed).
        h = jnp.dot(w1_ref[...], pooled,
                    preferred_element_type=jnp.float32) + b1_ref[...]        # (Cmid, 1)
        h = jnp.maximum(h, 0.0)
        # Second 1x1 conv + folded BN -> sigmoid.
        y = jnp.dot(w2_ref[...], h,
                    preferred_element_type=jnp.float32) + b2_ref[...]        # (C, 1)
        wei = 1.0 / (1.0 + jnp.exp(-y))
        o_ref[...] = wei.astype(o_ref.dtype).reshape(o_ref.shape)


def gap_forward(params, x):
    """x: (N, C, H, W) NCHW -> attention weights (N, C, 1, 1)."""
    N, C, H, W = x.shape
    HW = H * W
    Cmid = params["w1"].shape[0]
    itemsize = jnp.dtype(x.dtype).itemsize
    t_hw, hw_pad = _choose_hw_tile(HW, C, itemsize)

    xr = x.reshape(N, C, HW)                   # free contiguous reshape (no transpose)
    if hw_pad != HW:
        xr = jnp.pad(xr, ((0, 0), (0, 0), (0, hw_pad - HW)))   # zeros don't affect sum

    grid = (N, hw_pad // t_hw)
    kernel = functools.partial(_gap_kernel, inv_hw=1.0 / HW,
                               lane_chunks=t_hw // 128)

    cost = pl.CostEstimate(
        flops=N * C * hw_pad + 4 * N * C * Cmid,
        transcendentals=N * C,
        bytes_accessed=N * C * hw_pad * itemsize
        + 4 * (2 * C * Cmid + C + Cmid) + 4 * N * C,
    )

    out = pl.pallas_call(
        kernel,
        out_shape=jax.ShapeDtypeStruct((N, C, 1), jnp.float32),
        grid_spec=pltpu.PrefetchScalarGridSpec(
            num_scalar_prefetch=0,
            grid=grid,
            in_specs=[
                pl.BlockSpec((1, C, t_hw), lambda n, k: (n, 0, k)),   # x stream
                pl.BlockSpec((Cmid, C), lambda n, k: (0, 0)),         # w1 (BN folded)
                pl.BlockSpec((Cmid, 1), lambda n, k: (0, 0)),         # b1 (BN folded)
                pl.BlockSpec((C, Cmid), lambda n, k: (0, 0)),         # w2 (BN folded)
                pl.BlockSpec((C, 1), lambda n, k: (0, 0)),            # b2 (BN folded)
            ],
            out_specs=pl.BlockSpec((1, C, 1), lambda n, k: (n, 0, 0)),
            scratch_shapes=[pltpu.VMEM((C, 128), jnp.float32)],
        ),
        compiler_params=pltpu.CompilerParams(
            dimension_semantics=("parallel", "arbitrary"),
            vmem_limit_bytes=_VMEM_LIMIT_BYTES),
        cost_estimate=cost,
    )(xr, params["w1"], params["b1"], params["w2"], params["b2"])
    return out.reshape(N, C, 1, 1)


# ---------------------------------------------------------------------------
# Parameters: raw PyTorch-style params, BN folded at prep time for the kernel
# ---------------------------------------------------------------------------
def init_gap_raw_params(key, channels=64, r=4):
    cmid = channels // r
    f = jnp.float32
    ks = jax.random.split(key, 12)
    return {
        "conv1_w": jax.random.normal(ks[0], (cmid, channels, 1, 1), f) * (1.0 / channels) ** 0.5,
        "conv1_b": 0.1 * jax.random.normal(ks[1], (cmid,), f),
        "bn1_gamma": 1.0 + 0.1 * jax.random.normal(ks[2], (cmid,), f),
        "bn1_beta": 0.1 * jax.random.normal(ks[3], (cmid,), f),
        "bn1_mean": 0.1 * jax.random.normal(ks[4], (cmid,), f),
        "bn1_var": 1.0 + 0.1 * jnp.abs(jax.random.normal(ks[5], (cmid,), f)),
        "conv2_w": jax.random.normal(ks[6], (channels, cmid, 1, 1), f) * (1.0 / cmid) ** 0.5,
        "conv2_b": 0.1 * jax.random.normal(ks[7], (channels,), f),
        "bn2_gamma": 1.0 + 0.1 * jax.random.normal(ks[8], (channels,), f),
        "bn2_beta": 0.1 * jax.random.normal(ks[9], (channels,), f),
        "bn2_mean": 0.1 * jax.random.normal(ks[10], (channels,), f),
        "bn2_var": 1.0 + 0.1 * jnp.abs(jax.random.normal(ks[11], (channels,), f)),
    }


def fold_gap_params(raw, eps=1e-5):
    """Fold inference-mode BatchNorm into the 1x1-conv weights (one-time op)."""
    s1 = raw["bn1_gamma"] / jnp.sqrt(raw["bn1_var"] + eps)
    s2 = raw["bn2_gamma"] / jnp.sqrt(raw["bn2_var"] + eps)
    w1 = raw["conv1_w"][:, :, 0, 0] * s1[:, None]                       # (Cmid, C)
    b1 = (raw["conv1_b"] - raw["bn1_mean"]) * s1 + raw["bn1_beta"]      # (Cmid,)
    w2 = raw["conv2_w"][:, :, 0, 0] * s2[:, None]                       # (C, Cmid)
    b2 = (raw["conv2_b"] - raw["bn2_mean"]) * s2 + raw["bn2_beta"]      # (C,)
    return {"w1": w1, "b1": b1[:, None], "w2": w2, "b2": b2[:, None]}


def gap_reference(raw, x, eps=1e-5):
    """Pure-JAX eval-mode reference of the PyTorch module (unfolded BN math)."""
    N, C, H, W = x.shape
    pooled = x.mean(axis=(2, 3))                                        # AdaptiveAvgPool2d(1)
    z = pooled @ raw["conv1_w"][:, :, 0, 0].T + raw["conv1_b"]
    z = (z - raw["bn1_mean"]) / jnp.sqrt(raw["bn1_var"] + eps) * raw["bn1_gamma"] + raw["bn1_beta"]
    z = jnp.maximum(z, 0.0)
    y = z @ raw["conv2_w"][:, :, 0, 0].T + raw["conv2_b"]
    y = (y - raw["bn2_mean"]) / jnp.sqrt(raw["bn2_var"] + eps) * raw["bn2_gamma"] + raw["bn2_beta"]
    return jax.nn.sigmoid(y).reshape(N, C, 1, 1)


# ---------------------------------------------------------------------------
if __name__ == "__main__":
    key = jax.random.PRNGKey(0)
    kp, kx = jax.random.split(key)

    channels, r = 64, 4
    raw = init_gap_raw_params(kp, channels=channels, r=r)
    params = fold_gap_params(raw)

    N, H, W = 2, 16, 16
    x = jax.random.normal(kx, (N, channels, H, W), jnp.float32)

    fwd = jax.jit(gap_forward)
    wei = fwd(params, x)
    jax.block_until_ready(wei)

    assert wei.shape == (N, channels, 1, 1), wei.shape

    ref = gap_reference(raw, x)
    err = float(jnp.max(jnp.abs(wei - ref)))
    assert jnp.allclose(wei, ref, atol=3e-5, rtol=1e-4), err
    assert bool(jnp.all((wei > 0.0) & (wei < 1.0)))   # sigmoid range sanity check

    print("KERNEL_OK")
</pallas_src>

<mosaic_0001>
module attributes {stable_mosaic.version = 11 : i64} {
  func.func @_gap_kernel(%arg0: i32, %arg1: i32, %arg2: memref<1x64x256xf32, #tpu.memory_space<vmem>>, %arg3: memref<16x64xf32, #tpu.memory_space<vmem>>, %arg4: memref<16x1xf32, #tpu.memory_space<vmem>>, %arg5: memref<64x16xf32, #tpu.memory_space<vmem>>, %arg6: memref<64x1xf32, #tpu.memory_space<vmem>>, %arg7: memref<1x64x1xf32, #tpu.memory_space<vmem>>, %arg8: memref<64x128xf32, #tpu.memory_space<vmem>>) attributes {dimension_semantics = [#tpu.dimension_semantics<parallel>, #tpu.dimension_semantics<arbitrary>], iteration_bounds = array<i64: 2, 1>, scalar_prefetch = 0 : i64, scratch_operands = 1 : i64, tpu.core_type = #tpu.core_type<tc>, window_params = [{transform_indices = @transform_0, window_bounds = array<i64: 1, 64, 256>}, {pipeline_mode = #tpu.pipeline_mode<synchronous>, transform_indices = @transform_1, window_bounds = array<i64: 16, 64>}, {pipeline_mode = #tpu.pipeline_mode<synchronous>, transform_indices = @transform_2, window_bounds = array<i64: 16, 1>}, {pipeline_mode = #tpu.pipeline_mode<synchronous>, transform_indices = @transform_3, window_bounds = array<i64: 64, 16>}, {pipeline_mode = #tpu.pipeline_mode<synchronous>, transform_indices = @transform_4, window_bounds = array<i64: 64, 1>}, {transform_indices = @transform_5, window_bounds = array<i64: 1, 64, 1>}]} {
    %c0_i32 = arith.constant 0 : i32
    %0 = arith.cmpi eq, %arg1, %c0_i32 : i32
    %1 = arith.extui %0 : i1 to i32
    %c0_i32_0 = arith.constant 0 : i32
    %2 = arith.cmpi ne, %1, %c0_i32_0 : i32
    scf.if %2 {
      %cst_8 = arith.constant 0.000000e+00 : f32
      %12 = vector.broadcast %cst_8 : f32 to vector<64x128xf32>
      %c0_9 = arith.constant 0 : index
      %c0_10 = arith.constant 0 : index
      %13 = vector.load %arg8[%c0_9, %c0_10] : memref<64x128xf32, #tpu.memory_space<vmem>>, vector<64x128xf32>
      tpu.vector_store %arg8[%c0_9, %c0_10], %12 {strides = array<i32>} : memref<64x128xf32, #tpu.memory_space<vmem>>, vector<64x128xf32>,
    } else {
    }
    %c0 = arith.constant 0 : index
    %c0_1 = arith.constant 0 : index
    %3 = vector.load %arg8[%c0, %c0_1] : memref<64x128xf32, #tpu.memory_space<vmem>>, vector<64x128xf32>
    %cst = arith.constant 0.000000e+00 : f32
    %4 = vector.broadcast %cst : f32 to vector<64x128xf32>
    %c0_i32_2 = arith.constant 0 : i32
    %c2_i32 = arith.constant 2 : i32
    %5 = arith.addi %c0_i32_2, %c2_i32 : i32
    %c1_i32 = arith.constant 1 : i32
    %6 = scf.for %arg9 = %c0_i32_2 to %5 step %c1_i32 iter_args(%arg10 = %4) -> (vector<64x128xf32>)  : i32 {
      %c128_i32 = arith.constant 128 : i32
      %12 = arith.muli %arg9, %c128_i32 : i32
      %13 = tpu.assume_multiple %12, 128 : i32
      %c0_8 = arith.constant 0 : index
      %c0_9 = arith.constant 0 : index
      %14 = arith.index_cast %13 : i32 to index
      %15 = vector.load %arg2[%c0_8, %c0_9, %14] : memref<1x64x256xf32, #tpu.memory_space<vmem>>, vector<1x64x128xf32>
      %16 = vector.shape_cast %15 : vector<1x64x128xf32> to vector<64x128xf32>
      %17 = arith.addf %arg10, %16 : vector<64x128xf32>
      scf.yield %17 : vector<64x128xf32>
    }
    %c2_i32_3 = arith.constant 2 : i32
    %7 = arith.addf %3, %6 : vector<64x128xf32>
    %c0_4 = arith.constant 0 : index
    %c0_5 = arith.constant 0 : index
    %8 = vector.load %arg8[%c0_4, %c0_5] : memref<64x128xf32, #tpu.memory_space<vmem>>, vector<64x128xf32>
    tpu.vector_store %arg8[%c0_4, %c0_5], %7 {strides = array<i32>} : memref<64x128xf32, #tpu.memory_space<vmem>>, vector<64x128xf32>,
    %c0_i32_6 = arith.constant 0 : i32
    %9 = arith.cmpi eq, %arg1, %c0_i32_6 : i32
    %10 = arith.extui %9 : i1 to i32
    %c0_i32_7 = arith.constant 0 : i32
    %11 = arith.cmpi ne, %10, %c0_i32_7 : i32
    scf.if %11 {
      %c0_8 = arith.constant 0 : index
      %c0_9 = arith.constant 0 : index
      %12 = vector.load %arg8[%c0_8, %c0_9] : memref<64x128xf32, #tpu.memory_space<vmem>>, vector<64x128xf32>
      %cst_10 = arith.constant dense<0.000000e+00> : vector<64xf32>
      %13 = vector.multi_reduction <add>, %12, %cst_10 [1] : vector<64x128xf32> to vector<64xf32>
      %14 = vector.shape_cast %13 : vector<64xf32> to vector<64x1xf32>
      %cst_11 = arith.constant 3.906250e-03 : f32
      %15 = vector.broadcast %cst_11 : f32 to vector<64x1xf32>
      %16 = arith.mulf %14, %15 : vector<64x1xf32>
      %c0_12 = arith.constant 0 : index
      %c0_13 = arith.constant 0 : index
      %17 = vector.load %arg3[%c0_12, %c0_13] : memref<16x64xf32, #tpu.memory_space<vmem>>, vector<16x64xf32>
      %cst_14 = arith.constant dense<0.000000e+00> : vector<16x1xf32>
      %18 = tpu.matmul %17, %16, %cst_14 {dimension_numbers = #tpu.dot_dimension_numbers<[1], [0], [0], [1], [0, 0, 1, 1], [], []>} : vector<16x64xf32>, vector<64x1xf32>, vector<16x1xf32> -> vector<16x1xf32>
      %c0_15 = arith.constant 0 : index
      %c0_16 = arith.constant 0 : index
      %19 = vector.load %arg4[%c0_15, %c0_16] : memref<16x1xf32, #tpu.memory_space<vmem>>, vector<16x1xf32>
      %20 = arith.addf %18, %19 : vector<16x1xf32>
      %cst_17 = arith.constant 0.000000e+00 : f32
      %21 = vector.broadcast %cst_17 : f32 to vector<16x1xf32>
      %22 = arith.maximumf %20, %21 : vector<16x1xf32>
      %c0_18 = arith.constant 0 : index
      %c0_19 = arith.constant 0 : index
      %23 = vector.load %arg5[%c0_18, %c0_19] : memref<64x16xf32, #tpu.memory_space<vmem>>, vector<64x16xf32>
      %cst_20 = arith.constant dense<0.000000e+00> : vector<64x1xf32>
      %24 = tpu.matmul %23, %22, %cst_20 {dimension_numbers = #tpu.dot_dimension_numbers<[1], [0], [0], [1], [0, 0, 1, 1], [], []>} : vector<64x16xf32>, vector<16x1xf32>, vector<64x1xf32> -> vector<64x1xf32>
      %c0_21 = arith.constant 0 : index
      %c0_22 = arith.constant 0 : index
      %25 = vector.load %arg6[%c0_21, %c0_22] : memref<64x1xf32, #tpu.memory_space<vmem>>, vector<64x1xf32>
      %26 = arith.addf %24, %25 : vector<64x1xf32>
      %cst_23 = arith.constant 0.000000e+00 : f32
      %27 = vector.broadcast %cst_23 : f32 to vector<64x1xf32>
      %28 = arith.subf %27, %26 : vector<64x1xf32>
      %29 = math.exp %28 : vector<64x1xf32>
      %cst_24 = arith.constant 1.000000e+00 : f32
      %30 = vector.broadcast %cst_24 : f32 to vector<64x1xf32>
      %31 = arith.addf %30, %29 : vector<64x1xf32>
      %cst_25 = arith.constant 1.000000e+00 : f32
      %32 = vector.broadcast %cst_25 : f32 to vector<64x1xf32>
      %33 = arith.divf %32, %31 : vector<64x1xf32>
      %34 = vector.shape_cast %33 : vector<64x1xf32> to vector<1x64x1xf32>
      %c0_26 = arith.constant 0 : index
      %c0_27 = arith.constant 0 : index
      %c0_28 = arith.constant 0 : index
      %35 = vector.load %arg7[%c0_26, %c0_27, %c0_28] : memref<1x64x1xf32, #tpu.memory_space<vmem>>, vector<1x64x1xf32>
      tpu.vector_store %arg7[%c0_26, %c0_27, %c0_28], %34 {strides = array<i32>} : memref<1x64x1xf32, #tpu.memory_space<vmem>>, vector<1x64x1xf32>,
    } else {
    }
    return
  }
  func.func @transform_0(%arg0: i32, %arg1: i32) -> (i32, i32, i32) {
    %c0_i32 = arith.constant 0 : i32
    %c0_i32_0 = arith.constant 0 : i32
    return %arg0, %c0_i32, %arg1 : i32, i32, i32
  }
  func.func @transform_1(%arg0: i32, %arg1: i32) -> (i32, i32) {
    %c0_i32 = arith.constant 0 : i32
    %c0_i32_0 = arith.constant 0 : i32
    %c0_i32_1 = arith.constant 0 : i32
    return %c0_i32, %c0_i32_0 : i32, i32
  }
  func.func @transform_2(%arg0: i32, %arg1: i32) -> (i32, i32) {
    %c0_i32 = arith.constant 0 : i32
    %c0_i32_0 = arith.constant 0 : i32
    %c0_i32_1 = arith.constant 0 : i32
    return %c0_i32, %c0_i32_0 : i32, i32
  }
  func.func @transform_3(%arg0: i32, %arg1: i32) -> (i32, i32) {
    %c0_i32 = arith.constant 0 : i32
    %c0_i32_0 = arith.constant 0 : i32
    %c0_i32_1 = arith.constant 0 : i32
    return %c0_i32, %c0_i32_0 : i32, i32
  }
  func.func @transform_4(%arg0: i32, %arg1: i32) -> (i32, i32) {
    %c0_i32 = arith.constant 0 : i32
    %c0_i32_0 = arith.constant 0 : i32
    %c0_i32_1 = arith.constant 0 : i32
    return %c0_i32, %c0_i32_0 : i32, i32
  }
  func.func @transform_5(%arg0: i32, %arg1: i32) -> (i32, i32, i32) {
    %c0_i32 = arith.constant 0 : i32
    %c0_i32_0 = arith.constant 0 : i32
    %c0_i32_1 = arith.constant 0 : i32
    return %arg0, %c0_i32, %c0_i32_0 : i32, i32, i32
  }
}

</mosaic_0001>

<llo_original>
// kernel: gap_forward.1
$region0: #{gap_forward.1}
  #allocation0 [shape = 'u32[]', space=smem, size = 0x4, offset = 0x4, fixed_abs, tag = 'smem constant byte address 0x4 - core index']
  #allocation1 [shape = 'u32[144,128]{1,0:T(1,128)}', space=vmem, size = 0x12000, scoped, tag = 'internal scratch']
  #allocation2 [shape = 'f32[64,128]{1,0:T(8,128)}', space=vmem, size = 0x8000, scoped, tag = 'scratch operand']
  %s0 = inlined_call_operand.vmem [shape: f32[2,64,256], index: 0, kind: input, shape index: {}]
  %s1 = inlined_call_operand.vmem [shape: f32[16,64], index: 1, kind: input, shape index: {}]
  %s2 = inlined_call_operand.vmem [shape: f32[16,1], index: 2, kind: input, shape index: {}]
  %s3 = inlined_call_operand.vmem [shape: f32[64,16], index: 3, kind: input, shape index: {}]
  %s4 = inlined_call_operand.vmem [shape: f32[64,1], index: 4, kind: input, shape index: {}]
  %s5 = inlined_call_operand.vmem [shape: f32[2,64,1], index: 5, kind: output, shape index: {}]
  %s6 = sld [smem:[#allocation0]]
  $region68: #{gap_forward.1} parent=0
    _
  %s8 = ssub.s32 1, %s6
  %s9 = scalar_select 0, %s8, %s6
  loop: start=0, step=1, limit=4
  $region2: #{gap_forward.1} parent=0 // loop_pre_header
    _
  $region3: #{gap_forward.1} parent=0 // loop_header
    %s11 = sphi 0, %s15
    %p12 = scmp.ge.s32.totalorder %s11, 4
    %s18 = sphi 0, %s30
    %s19 = sphi 0, %s26
    %s20 = sphi 0, %s18
    %s21 = sphi 0, %s19
    %s22 = sphi 0, %s20
    %s23 = sphi 0, %s21
    %s35 = sphi 0, %s37
    %s38 = sphi 0, %s35
    %s39 = sphi 0, %s38
    %s55 = sphi 0, %s39
    %s59 = sphi 0, %s59
    %s61 = sphi 0, %s59
    %s62 = sphi 0, %s61
    %s76 = sphi 0, %s62
    %s80 = sphi 0, %s80
    %s82 = sphi 0, %s80
    %s83 = sphi 0, %s82
    %s97 = sphi 0, %s83
    %s101 = sphi 0, %s101
    %s103 = sphi 0, %s101
    %s104 = sphi 0, %s103
    %s118 = sphi 0, %s104
    %s122 = sphi 0, %s122
    %s124 = sphi 0, %s122
    %s125 = sphi 0, %s124
    %s139 = sphi 0, %s125
    %s145 = sphi 0, %s147
    %s148 = sphi 0, %s145
    %s149 = sphi 0, %s148
    %s165 = sphi 0, %s149
  $region4: #{gap_forward.1} parent=0 // loop_header_branch
    %14 = sbr.rel (%p12) target = $region8
  $region5: #{gap_forward.1} parent=0 // loop_body
    %s16 = ssub.s32 %s11, 1
    %s17 = ssub.s32 %s11, 2
    %s24 = sadd.s32 1, %s19
    %p25 = scmp.ge.s32.totalorder %s24, 1
    %s26 = scalar_select %p25, 0, %s24
    %s27 = sadd.s32 1, %s18
    %s28 = scalar_select %p25, %s27, %s18
    %p29 = scmp.ge.s32.totalorder %s28, 2
    %s30 = scalar_select %p29, 0, %s28
    %s31 = ssub.s32 %s18, %s30
    %s32 = ssub.s32 %s19, %s26
    %s33 = sor.u32 %s31, %s32
    %p34 = scmp.eq.s32.totalorder %s33, 0
    %s36 = sadd.s32 %s35, 1
    %s37 = scalar_select %p34, %s35, %s36
    %p40 = pneg %p34
    %p41 = scmp.eq.s32.totalorder %s11, 1
    %p42 = por %p40, %p41
    %p43 = scmp.ne.s32.totalorder %s35, %s38
    %p44 = scmp.eq.s32.totalorder %s11, 0
    %p45 = por %p43, %p44
    %p46 = scmp.ne.s32.totalorder %s35, %s38
    %p47 = scmp.eq.s32.totalorder %s16, 1
    %p48 = por %p46, %p47
    %p49 = scmp.ne.s32.totalorder %s38, %s39
    %p50 = scmp.eq.s32.totalorder %s16, 0
    %p51 = por %p49, %p50
    %p52 = scmp.ne.s32.totalorder %s38, %s39
    %p53 = scmp.eq.s32.totalorder %s17, 1
    %p54 = por %p52, %p53
    %p56 = scmp.ne.s32.totalorder %s39, %s55
    %p57 = scmp.eq.s32.totalorder %s17, 0
    %p58 = por %p56, %p57
    %s60 = sadd.s32 %s59, 1
    %p63 = scmp.eq.s32.totalorder %s11, 1
    %p64 = scmp.ne.s32.totalorder %s59, %s61
    %p65 = scmp.eq.s32.totalorder %s11, 0
    %p66 = por %p64, %p65
    %p67 = scmp.ne.s32.totalorder %s59, %s61
    %p68 = scmp.eq.s32.totalorder %s16, 1
    %p69 = por %p67, %p68
    %p70 = scmp.ne.s32.totalorder %s61, %s62
    %p71 = scmp.eq.s32.totalorder %s16, 0
    %p72 = por %p70, %p71
    %p73 = scmp.ne.s32.totalorder %s61, %s62
    %p74 = scmp.eq.s32.totalorder %s17, 1
    %p75 = por %p73, %p74
    %p77 = scmp.ne.s32.totalorder %s62, %s76
    %p78 = scmp.eq.s32.totalorder %s17, 0
    %p79 = por %p77, %p78
    %s81 = sadd.s32 %s80, 1
    %p84 = scmp.eq.s32.totalorder %s11, 1
    %p85 = scmp.ne.s32.totalorder %s80, %s82
    %p86 = scmp.eq.s32.totalorder %s11, 0
    %p87 = por %p85, %p86
    %p88 = scmp.ne.s32.totalorder %s80, %s82
    %p89 = scmp.eq.s32.totalorder %s16, 1
    %p90 = por %p88, %p89
    %p91 = scmp.ne.s32.totalorder %s82, %s83
    %p92 = scmp.eq.s32.totalorder %s16, 0
    %p93 = por %p91, %p92
    %p94 = scmp.ne.s32.totalorder %s82, %s83
    %p95 = scmp.eq.s32.totalorder %s17, 1
    %p96 = por %p94, %p95
    %p98 = scmp.ne.s32.totalorder %s83, %s97
    %p99 = scmp.eq.s32.totalorder %s17, 0
    %p100 = por %p98, %p99
    %s102 = sadd.s32 %s101, 1
    %p105 = scmp.eq.s32.totalorder %s11, 1
    %p106 = scmp.ne.s32.totalorder %s101, %s103
    %p107 = scmp.eq.s32.totalorder %s11, 0
    %p108 = por %p106, %p107
    %p109 = scmp.ne.s32.totalorder %s101, %s103
    %p110 = scmp.eq.s32.totalorder %s16, 1
    %p111 = por %p109, %p110
    %p112 = scmp.ne.s32.totalorder %s103, %s104
    %p113 = scmp.eq.s32.totalorder %s16, 0
    %p114 = por %p112, %p113
    %p115 = scmp.ne.s32.totalorder %s103, %s104
    %p116 = scmp.eq.s32.totalorder %s17, 1
    %p117 = por %p115, %p116
    %p119 = scmp.ne.s32.totalorder %s104, %s118
    %p120 = scmp.eq.s32.totalorder %s17, 0
    %p121 = por %p119, %p120
    %s123 = sadd.s32 %s122, 1
    %p126 = scmp.eq.s32.totalorder %s11, 1
    %p127 = scmp.ne.s32.totalorder %s122, %s124
    %p128 = scmp.eq.s32.totalorder %s11, 0
    %p129 = por %p127, %p128
    %p130 = scmp.ne.s32.totalorder %s122, %s124
    %p131 = scmp.eq.s32.totalorder %s16, 1
    %p132 = por %p130, %p131
    %p133 = scmp.ne.s32.totalorder %s124, %s125
    %p134 = scmp.eq.s32.totalorder %s16, 0
    %p135 = por %p133, %p134
    %p136 = scmp.ne.s32.totalorder %s124, %s125
    %p137 = scmp.eq.s32.totalorder %s17, 1
    %p138 = por %p136, %p137
    %p140 = scmp.ne.s32.totalorder %s125, %s139
    %p141 = scmp.eq.s32.totalorder %s17, 0
    %p142 = por %p140, %p141
    %s143 = ssub.s32 %s18, %s30
    %p144 = scmp.eq.s32.totalorder %s143, 0
    %s146 = sadd.s32 %s145, 1
    %s147 = scalar_select %p144, %s145, %s146
    %p150 = pneg %p144
    %p151 = scmp.eq.s32.totalorder %s11, 1
    %p152 = por %p150, %p151
    %p153 = scmp.ne.s32.totalorder %s145, %s148
    %p154 = scmp.eq.s32.totalorder %s11, 0
    %p155 = por %p153, %p154
    %p156 = scmp.ne.s32.totalorder %s145, %s148
    %p157 = scmp.eq.s32.totalorder %s16, 1
    %p158 = por %p156, %p157
    %p159 = scmp.ne.s32.totalorder %s148, %s149
    %p160 = scmp.eq.s32.totalorder %s16, 0
    %p161 = por %p159, %p160
    %p162 = scmp.ne.s32.totalorder %s148, %s149
    %p163 = scmp.eq.s32.totalorder %s17, 1
    %p164 = por %p162, %p163
    %p166 = scmp.ne.s32.totalorder %s149, %s165
    %p167 = scmp.eq.s32.totalorder %s17, 0
    %p168 = por %p166, %p167
    %p169 = scmp.le.s32.totalorder 1, %s11
    %p170 = scmp.lt.s32.totalorder %s11, 3
    %p171 = pnand %p169, %p170
    %p172 = pneg %p171
    // Predicated region
    $region9: #{gap_forward.1} parent=5 // pred_check
      _
    $region10: #{gap_forward.1} parent=5 // pred_check_branch
      %174 = sbr.rel (%p171) target = $region12
    $region11: #{gap_forward.1} parent=5 // pred_region
      %s175 = ssub.s32 %s11, 1
      // Predicated region
      $region13: #{gap_forward.1} parent=11 // pred_check
        %p176 = pneg %p72
      $region14: #{gap_forward.1} parent=11 // pred_check_branch
        %178 = sbr.rel (%p176) target = $region16
      $region15: #{gap_forward.1} parent=11 // pred_region
        _
      $region16: #{gap_forward.1} parent=11 // pred_fallthru
        _
      // Predicated region
      $region17: #{gap_forward.1} parent=11 // pred_check
        %p179 = pneg %p93
      $region18: #{gap_forward.1} parent=11 // pred_check_branch
        %181 = sbr.rel (%p179) target = $region20
      $region19: #{gap_forward.1} parent=11 // pred_region
        _
      $region20: #{gap_forward.1} parent=11 // pred_fallthru
        _
      // Predicated region
      $region21: #{gap_forward.1} parent=11 // pred_check
        %p182 = pneg %p114
      $region22: #{gap_forward.1} parent=11 // pred_check_branch
        %184 = sbr.rel (%p182) target = $region24
      $region23: #{gap_forward.1} parent=11 // pred_region
        _
      $region24: #{gap_forward.1} parent=11 // pred_fallthru
        _
      // Predicated region
      $region25: #{gap_forward.1} parent=11 // pred_check
        %p185 = pneg %p135
      $region26: #{gap_forward.1} parent=11 // pred_check_branch
        %187 = sbr.rel (%p185) target = $region28
      $region27: #{gap_forward.1} parent=11 // pred_region
        _
      $region28: #{gap_forward.1} parent=11 // pred_fallthru
        _
    $region12: #{gap_forward.1} parent=5 // pred_fallthru
      _
    %p188 = scmp.lt.s32.totalorder %s11, 2
    // Predicated region
    $region29: #{gap_forward.1} parent=5 // pred_check
      %p189 = pneg %p188
    $region30: #{gap_forward.1} parent=5 // pred_check_branch
      %191 = sbr.rel (%p189) target = $region32
    $region31: #{gap_forward.1} parent=5 // pred_region
      // Predicated region
      $region33: #{gap_forward.1} parent=31 // pred_check
        %p192 = pneg %p45
      $region34: #{gap_forward.1} parent=31 // pred_check_branch
        %194 = sbr.rel (%p192) target = $region36
      $region35: #{gap_forward.1} parent=31 // pred_region
        %s195 = smul.u32 2, %s19
        %p196 = scmp.lt.s32.totalorder %s18, 1
        %s197 = scalar_select %p196, %s18, 1
        %p198 = scmp.lt.s32.totalorder %s195, 1
        %s199 = scalar_select %p198, %s195, 1
        %s200 = smul.addr %s197, 16
        %s201 = sadd.s32 %s199, %s200
        %s202 = smul.addr %s201, 8
        %s203 = scalar_lea.vmem %s0, %s202
        %s204 = smul.u32 2, %s19
      $region36: #{gap_forward.1} parent=31 // pred_fallthru
        _
    $region32: #{gap_forward.1} parent=5 // pred_fallthru
      _
    %p205 = scmp.le.s32.totalorder 1, %s11
    %p206 = scmp.lt.s32.totalorder %s11, 3
    %p207 = pnand %p205, %p206
    %p208 = pneg %p207
    // Predicated region
    $region37: #{gap_forward.1} parent=5 // pred_check
      _
    $region38: #{gap_forward.1} parent=5 // pred_check_branch
      %210 = sbr.rel (%p207) target = $region40
    $region39: #{gap_forward.1} parent=5 // pred_region
      %s211 = ssub.s32 %s11, 1
      %s212 = smul.u32 2, %s21
      %p213 = scmp.lt.s32.totalorder %s20, 1
      %s214 = scalar_select %p213, %s20, 1
      %p215 = scmp.lt.s32.totalorder %s212, 1
      %s216 = scalar_select %p215, %s212, 1
      %s217 = smul.addr %s214, 16
      %s218 = sadd.s32 %s216, %s217
      %s219 = smul.addr %s218, 8
      %s220 = scalar_lea.vmem %s0, %s219
      %p221 = pneg %p51
      %p222 = pneg %p48
      %p223 = pneg %p72
      %p224 = pneg %p69
      %p225 = pneg %p93
      %p226 = pneg %p90
      %p227 = pneg %p114
      %p228 = pneg %p111
      %p229 = pneg %p135
      %p230 = pneg %p132
      %p231 = pneg %p161
      %p232 = pneg %p158
      %p233 = scmp.lt.s32.totalorder %s20, 1
      %s234 = scalar_select %p233, %s20, 1
      %s235 = smul.addr %s234, 8
      %s236 = smul.addr %s235, 8
      %s237 = scalar_lea.vmem %s5, %s236
      %s238 = smul.u32 2, %s21
      %p239 = scmp.lt.s32.totalorder %s20, 1
      %s240 = scalar_select %p239, %s20, 1
      %p241 = scmp.lt.s32.totalorder %s238, 1
      %s242 = scalar_select %p241, %s238, 1
      %s243 = smul.addr %s240, 16
      %s244 = sadd.s32 %s242, %s243
      %s245 = smul.addr %s244, 8
      %s246 = scalar_lea.vmem %s0, %s245
      %s247 = smul.u32 2, %s21
      %p248 = scmp.lt.s32.totalorder %s20, 1
      %s249 = scalar_select %p248, %s20, 1
      %s250 = smul.addr %s249, 8
      %s251 = smul.addr %s250, 8
      %s252 = scalar_lea.vmem %s5, %s251
      %p253 = scmp.eq.s32.totalorder %s21, 0
      // Predicated region
      $region41: #{gap_forward.1} parent=39 // pred_check
        %p254 = pneg %p253
      $region42: #{gap_forward.1} parent=39 // pred_check_branch
        %256 = sbr.rel (%p254) target = $region44
      $region43: #{gap_forward.1} parent=39 // pred_region
        %257 = vst [vmem:[#allocation2] sm:$0xff] 0.0
        %258 = vst [vmem:[#allocation2 + $0x8] sm:$0xff] 0.0
        %259 = vst [vmem:[#allocation2 + $0x10] sm:$0xff] 0.0
        %260 = vst [vmem:[#allocation2 + $0x18] sm:$0xff] 0.0
        %261 = vst [vmem:[#allocation2 + $0x20] sm:$0xff] 0.0
        %262 = vst [vmem:[#allocation2 + $0x28] sm:$0xff] 0.0
        %263 = vst [vmem:[#allocation2 + $0x30] sm:$0xff] 0.0
        %264 = vst [vmem:[#allocation2 + $0x38] sm:$0xff] 0.0
      $region44: #{gap_forward.1} parent=39 // pred_fallthru
        _
      %v265 = vld [vmem:[#allocation2] sm:$0xff]
      %v266 = vld [vmem:[#allocation2 + $0x8] sm:$0xff]
      %v267 = vld [vmem:[#allocation2 + $0x10] sm:$0xff]
      %v268 = vld [vmem:[#allocation2 + $0x18] sm:$0xff]
      %v269 = vld [vmem:[#allocation2 + $0x20] sm:$0xff]
      %v270 = vld [vmem:[#allocation2 + $0x28] sm:$0xff]
      %v271 = vld [vmem:[#allocation2 + $0x30] sm:$0xff]
      %v272 = vld [vmem:[#allocation2 + $0x38] sm:$0xff]
      loop: start=0, step=1, limit=2
      $region45: #{gap_forward.1} parent=39 // loop_pre_header
        _
      $region46: #{gap_forward.1} parent=39 // loop_header
        %s274 = sphi 0, %s278
        %p275 = scmp.ge.s32.totalorder %s274, 2
        %v279 = vphi 0.0, %v300
        %v280 = vphi 0.0, %v301
        %v281 = vphi 0.0, %v302
        %v282 = vphi 0.0, %v303
        %v283 = vphi 0.0, %v304
        %v284 = vphi 0.0, %v305
        %v285 = vphi 0.0, %v306
        %v286 = vphi 0.0, %v307
      $region47: #{gap_forward.1} parent=39 // loop_header_branch
        %277 = sbr.rel (%p275) target = $region51
      $region48: #{gap_forward.1} parent=39 // loop_body
        %s287 = smul.u32 %s274, 128
        %s288 = sshra.s32 %s287, 7
        %s289 = sand.u32 %s287, 127
        %s290 = smul.addr %s288, 8
        %s291 = scalar_lea.vmem %s246, %s290
        %v292 = vld [vmem:[%s291] sm:$0xff]
        %v293 = vld [vmem:[%s291 + $0x10] sm:$0xff]
        %v294 = vld [vmem:[%s291 + $0x20] sm:$0xff]
        %v295 = vld [vmem:[%s291 + $0x30] sm:$0xff]
        %v296 = vld [vmem:[%s291 + $0x40] sm:$0xff]
        %v297 = vld [vmem:[%s291 + $0x50] sm:$0xff]
        %v298 = vld [vmem:[%s291 + $0x60] sm:$0xff]
        %v299 = vld [vmem:[%s291 + $0x70] sm:$0xff]
        %v300 = vadd.f32 %v279, %v292
        %v301 = vadd.f32 %v280, %v293
        %v302 = vadd.f32 %v281, %v294
        %v303 = vadd.f32 %v282, %v295
        %v304 = vadd.f32 %v283, %v296
        %v305 = vadd.f32 %v284, %v297
        %v306 = vadd.f32 %v285, %v298
        %v307 = vadd.f32 %v286, %v299
      $region49: #{gap_forward.1} parent=39 // loop_footer
        %s278 = sadd.s32 1, %s274
      $region50: #{gap_forward.1} parent=39 // loop_footer_branch
        %273 = sbr.rel target = $region46
      $region51: #{gap_forward.1} parent=39 // loop_exit
        _
      %v308 = vadd.f32 %v265, %v279
      %v309 = vadd.f32 %v266, %v280
      %v310 = vadd.f32 %v267, %v281
      %v311 = vadd.f32 %v268, %v282
      %v312 = vadd.f32 %v269, %v283
      %v313 = vadd.f32 %v270, %v284
      %v314 = vadd.f32 %v271, %v285
      %v315 = vadd.f32 %v272, %v286
      %316 = vst [vmem:[#allocation2] sm:$0xff] %v308
      %317 = vst [vmem:[#allocation2 + $0x8] sm:$0xff] %v309
      %318 = vst [vmem:[#allocation2 + $0x10] sm:$0xff] %v310
      %319 = vst [vmem:[#allocation2 + $0x18] sm:$0xff] %v311
      %320 = vst [vmem:[#allocation2 + $0x20] sm:$0xff] %v312
      %321 = vst [vmem:[#allocation2 + $0x28] sm:$0xff] %v313
      %322 = vst [vmem:[#allocation2 + $0x30] sm:$0xff] %v314
      %323 = vst [vmem:[#allocation2 + $0x38] sm:$0xff] %v315
      // Predicated region
      $region52: #{gap_forward.1} parent=39 // pred_check
        %p324 = pneg %p253
      $region53: #{gap_forward.1} parent=39 // pred_check_branch
        %326 = sbr.rel (%p324) target = $region55
      $region54: #{gap_forward.1} parent=39 // pred_region
        %v327 = vld [vmem:[#allocation2] sm:$0xff]
        %v328 = vld [vmem:[#allocation2 + $0x8] sm:$0xff]
        %v329 = vld [vmem:[#allocation2 + $0x10] sm:$0xff]
        %v330 = vld [vmem:[#allocation2 + $0x18] sm:$0xff]
        %v331 = vld [vmem:[#allocation2 + $0x20] sm:$0xff]
        %v332 = vld [vmem:[#allocation2 + $0x28] sm:$0xff]
        %v333 = vld [vmem:[#allocation2 + $0x30] sm:$0xff]
        %v334 = vld [vmem:[#allocation2 + $0x38] sm:$0xff]
        %335 = vadd.xlane.f32.xlu0 %v327
        %v336 = vpop.xlane.xlu0 %335
        %337 = vadd.xlane.f32.xlu0 %v328
        %v338 = vpop.xlane.xlu0 %337
        %339 = vadd.xlane.f32.xlu0 %v329
        %v340 = vpop.xlane.xlu0 %339
        %341 = vadd.xlane.f32.xlu0 %v330
        %v342 = vpop.xlane.xlu0 %341
        %343 = vadd.xlane.f32.xlu0 %v331
        %v344 = vpop.xlane.xlu0 %343
        %345 = vadd.xlane.f32.xlu0 %v332
        %v346 = vpop.xlane.xlu0 %345
        %347 = vadd.xlane.f32.xlu0 %v333
        %v348 = vpop.xlane.xlu0 %347
        %349 = vadd.xlane.f32.xlu0 %v334
        %v350 = vpop.xlane.xlu0 %349
        %v351 = vmul.f32 %v336, 0.00390625
        %v352 = vmul.f32 %v338, 0.00390625
        %v353 = vmul.f32 %v340, 0.00390625
        %v354 = vmul.f32 %v342, 0.00390625
        %v355 = vmul.f32 %v344, 0.00390625
        %v356 = vmul.f32 %v346, 0.00390625
        %v357 = vmul.f32 %v348, 0.00390625
        %v358 = vmul.f32 %v350, 0.00390625
        %v359 = vld [vmem:[%s1] sm:$0xff]
        %v360 = vld [vmem:[%s1 + $0x8] sm:$0xff]
        %v361 = vld [vmem:[%s2] sm:$0xff]
        %v362 = vld [vmem:[%s2 + $0x8] sm:$0xff]
        %vm363 = vcmask 523264
        %v365 = vsel %vm363, %v359, 0
        %v368 = vsel %vm363, %v360, 0
        %370 = vmatprep.subr.mxu0 0.0
        %371 = vmatpush1.msra.mxu0 %v351
        %372 = vmatprep.subr.mxu0 0.0
        %373 = vmatpush1.msra.mxu0 %v352
        %374 = vmatprep.subr.mxu0 0.0
        %375 = vmatpush1.msra.mxu0 %v353
        %376 = vmatprep.subr.mxu0 0.0
        %377 = vmatpush1.msra.mxu0 %v354
        %378 = vmatprep.subr.mxu0 0.0
        %379 = vmatpush1.msra.mxu0 %v355
        %380 = vmatprep.subr.mxu0 0.0
        %381 = vmatpush1.msra.mxu0 %v356
        %382 = vmatprep.subr.mxu0 0.0
        %383 = vmatpush1.msra.mxu0 %v357
        %384 = vmatprep.subr.mxu0 0.0
        %385 = vmatpush1.msra.mxu0 %v358
        %386 = vmatprep.subr.mxu0 0.0
        %387 = vmatpush1.msra.mxu0 0.0
        %388 = vmatprep.subr.mxu0 0.0
        %389 = vmatpush1.msra.mxu0 0.0
        %390 = vmatprep.subr.mxu0 0.0
        %391 = vmatpush1.msra.mxu0 0.0
        %392 = vmatprep.subr.mxu0 0.0
        %393 = vmatpush1.msra.mxu0 0.0
        %394 = vmatprep.subr.mxu0 0.0
        %395 = vmatpush1.msra.mxu0 0.0
        %396 = vmatprep.subr.mxu0 0.0
        %397 = vmatpush1.msra.mxu0 0.0
        %398 = vmatprep.subr.mxu0 0.0
        %399 = vmatpush1.msra.mxu0 0.0
        %400 = vmatprep.subr.mxu0 0.0
        %401 = vmatpush1.msra.mxu0 0.0
        %402 = vmatprep.subr.mxu0 0.0
        %403 = vmatpush1.msra.mxu0 0.0
        %404 = vmatprep.subr.mxu0 0.0
        %405 = vmatpush1.msra.mxu0 0.0
        %406 = vmatprep.subr.mxu0 0.0
        %407 = vmatpush1.msra.mxu0 0.0
        %408 = vmatprep.subr.mxu0 0.0
        %409 = vmatpush1.msra.mxu0 0.0
        %410 = vmatprep.subr.mxu0 0.0
        %411 = vmatpush1.msra.mxu0 0.0
        %412 = vmatprep.subr.mxu0 0.0
        %413 = vmatpush1.msra.mxu0 0.0
        %414 = vmatprep.subr.mxu0 0.0
        %415 = vmatpush1.msra.mxu0 0.0
        %416 = vmatprep.subr.mxu0 0.0
        %417 = vmatpush1.msra.mxu0 0.0
        %418 = vmatprep.subr.mxu0 0.0
        %419 = vmatpush1.msra.mxu0 0.0
        %420 = vmatprep.subr.mxu0 0.0
        %421 = vmatpush1.msra.mxu0 0.0
        %422 = vmatprep.subr.mxu0 0.0
        %423 = vmatpush1.msra.mxu0 0.0
        %424 = vmatprep.subr.mxu0 0.0
        %425 = vmatpush1.msra.mxu0 0.0
        %426 = vmatprep.subr.mxu0 0.0
        %427 = vmatpush1.msra.mxu0 0.0
        %428 = vmatprep.subr.mxu0 0.0
        %429 = vmatpush1.msra.mxu0 0.0
        %430 = vmatprep.subr.mxu0 0.0
        %431 = vmatpush1.msra.mxu0 0.0
        %432 = vmatprep.subr.mxu0 0.0
        %433 = vmatpush1.msra.mxu0 0.0
        %434 = vmatprep.mubr.f32.mxu0 0.0
        %435 = vmatmul.mubr.f32.gmra.mrb[0].mxu0 %v365
        %v436 = vpop.f32.mrb[0].mxu0
        %v437 = vadd.f32 %v361, %v436
        %v438 = vpop.f32.mrb[0].mxu0
        %439 = vmatprep.mubr.f32.mxu0 0.0
        %440 = vmatmul.mubr.f32.gmra.mrb[0].mxu0 %v368
        %v441 = vpop.f32.mrb[0].mxu0
        %v442 = vadd.f32 %v362, %v441
        %v443 = vpop.f32.mrb[0].mxu0
        %444 = vdwg.mxu0
        %v445 = vmax.f32 %v437, 0.0
        %v446 = vmax.f32 %v442, 0.0
        %v447 = vld [vmem:[%s3] sm:$0xff]
        %v448 = vld [vmem:[%s3 + $0x8] sm:$0xff]
        %v449 = vld [vmem:[%s3 + $0x10] sm:$0xff]
        %v450 = vld [vmem:[%s3 + $0x18] sm:$0xff]
        %v451 = vld [vmem:[%s3 + $0x20] sm:$0xff]
        %v452 = vld [vmem:[%s3 + $0x28] sm:$0xff]
        %v453 = vld [vmem:[%s3 + $0x30] sm:$0xff]
        %v454 = vld [vmem:[%s3 + $0x38] sm:$0xff]
        %v455 = vld [vmem:[%s4] sm:$0xff]
        %v456 = vld [vmem:[%s4 + $0x8] sm:$0xff]
        %v457 = vld [vmem:[%s4 + $0x10] sm:$0xff]
        %v458 = vld [vmem:[%s4 + $0x18] sm:$0xff]
        %v459 = vld [vmem:[%s4 + $0x20] sm:$0xff]
        %v460 = vld [vmem:[%s4 + $0x28] sm:$0xff]
        %v461 = vld [vmem:[%s4 + $0x30] sm:$0xff]
        %v462 = vld [vmem:[%s4 + $0x38] sm:$0xff]
        %vm463 = vcmask 130048
        %v465 = vsel %vm463, %v447, 0
        %v468 = vsel %vm463, %v448, 0
        %v471 = vsel %vm463, %v449, 0
        %v474 = vsel %vm463, %v450, 0
        %v477 = vsel %vm463, %v451, 0
        %v480 = vsel %vm463, %v452, 0
        %v483 = vsel %vm463, %v453, 0
        %v486 = vsel %vm463, %v454, 0
        %488 = vmatprep.subr.mxu0 0.0
        %489 = vmatpush1.msra.mxu0 %v445
        %490 = vmatprep.subr.mxu0 0.0
        %491 = vmatpush1.msra.mxu0 %v446
        %492 = vmatprep.subr.mxu0 0.0
        %493 = vmatpush1.msra.mxu0 0.0
        %494 = vmatprep.subr.mxu0 0.0
        %495 = vmatpush1.msra.mxu0 0.0
        %496 = vmatprep.subr.mxu0 0.0
        %497 = vmatpush1.msra.mxu0 0.0
        %498 = vmatprep.subr.mxu0 0.0
        %499 = vmatpush1.msra.mxu0 0.0
        %500 = vmatprep.subr.mxu0 0.0
        %501 = vmatpush1.msra.mxu0 0.0
        %502 = vmatprep.subr.mxu0 0.0
        %503 = vmatpush1.msra.mxu0 0.0
        %504 = vmatprep.subr.mxu0 0.0
        %505 = vmatpush1.msra.mxu0 0.0
        %506 = vmatprep.subr.mxu0 0.0
        %507 = vmatpush1.msra.mxu0 0.0
        %508 = vmatprep.subr.mxu0 0.0
        %509 = vmatpush1.msra.mxu0 0.0
        %510 = vmatprep.subr.mxu0 0.0
        %511 = vmatpush1.msra.mxu0 0.0
        %512 = vmatprep.subr.mxu0 0.0
        %513 = vmatpush1.msra.mxu0 0.0
        %514 = vmatprep.subr.mxu0 0.0
        %515 = vmatpush1.msra.mxu0 0.0
        %516 = vmatprep.subr.mxu0 0.0
        %517 = vmatpush1.msra.mxu0 0.0
        %518 = vmatprep.subr.mxu0 0.0
        %519 = vmatpush1.msra.mxu0 0.0
        %520 = vmatprep.subr.mxu0 0.0
        %521 = vmatpush1.msra.mxu0 0.0
        %522 = vmatprep.subr.mxu0 0.0
        %523 = vmatpush1.msra.mxu0 0.0
        %524 = vmatprep.subr.mxu0 0.0
        %525 = vmatpush1.msra.mxu0 0.0
        %526 = vmatprep.subr.mxu0 0.0
        %527 = vmatpush1.msra.mxu0 0.0
        %528 = vmatprep.subr.mxu0 0.0
        %529 = vmatpush1.msra.mxu0 0.0
        %530 = vmatprep.subr.mxu0 0.0
        %531 = vmatpush1.msra.mxu0 0.0
        %532 = vmatprep.subr.mxu0 0.0
        %533 = vmatpush1.msra.mxu0 0.0
        %534 = vmatprep.subr.mxu0 0.0
        %535 = vmatpush1.msra.mxu0 0.0
        %536 = vmatprep.subr.mxu0 0.0
        %537 = vmatpush1.msra.mxu0 0.0
        %538 = vmatprep.subr.mxu0 0.0
        %539 = vmatpush1.msra.mxu0 0.0
        %540 = vmatprep.subr.mxu0 0.0
        %541 = vmatpush1.msra.mxu0 0.0
        %542 = vmatprep.subr.mxu0 0.0
        %543 = vmatpush1.msra.mxu0 0.0
        %544 = vmatprep.subr.mxu0 0.0
        %545 = vmatpush1.msra.mxu0 0.0
        %546 = vmatprep.subr.mxu0 0.0
        %547 = vmatpush1.msra.mxu0 0.0
        %548 = vmatprep.subr.mxu0 0.0
        %549 = vmatpush1.msra.mxu0 0.0
        %550 = vmatprep.subr.mxu0 0.0
        %551 = vmatpush1.msra.mxu0 0.0
        %552 = vmatprep.mubr.f32.mxu0 0.0
        %553 = vmatmul.mubr.f32.gmra.mrb[0].mxu0 %v465
        %v554 = vpop.f32.mrb[0].mxu0
        %v555 = vadd.f32 %v455, %v554
        %v556 = vpop.f32.mrb[0].mxu0
        %557 = vmatprep.mubr.f32.mxu0 0.0
        %558 = vmatmul.mubr.f32.gmra.mrb[0].mxu0 %v468
        %v559 = vpop.f32.mrb[0].mxu0
        %v560 = vadd.f32 %v456, %v559
        %v561 = vpop.f32.mrb[0].mxu0
        %562 = vmatprep.mubr.f32.mxu0 0.0
        %563 = vmatmul.mubr.f32.gmra.mrb[0].mxu0 %v471
        %v564 = vpop.f32.mrb[0].mxu0
        %v565 = vadd.f32 %v457, %v564
        %v566 = vpop.f32.mrb[0].mxu0
        %567 = vmatprep.mubr.f32.mxu0 0.0
        %568 = vmatmul.mubr.f32.gmra.mrb[0].mxu0 %v474
        %v569 = vpop.f32.mrb[0].mxu0
        %v570 = vadd.f32 %v458, %v569
        %v571 = vpop.f32.mrb[0].mxu0
        %572 = vmatprep.mubr.f32.mxu0 0.0
        %573 = vmatmul.mubr.f32.gmra.mrb[0].mxu0 %v477
        %v574 = vpop.f32.mrb[0].mxu0
        %v575 = vadd.f32 %v459, %v574
        %v576 = vpop.f32.mrb[0].mxu0
        %577 = vmatprep.mubr.f32.mxu0 0.0
        %578 = vmatmul.mubr.f32.gmra.mrb[0].mxu0 %v480
        %v579 = vpop.f32.mrb[0].mxu0
        %v580 = vadd.f32 %v460, %v579
        %v581 = vpop.f32.mrb[0].mxu0
        %582 = vmatprep.mubr.f32.mxu0 0.0
        %583 = vmatmul.mubr.f32.gmra.mrb[0].mxu0 %v483
        %v584 = vpop.f32.mrb[0].mxu0
        %v585 = vadd.f32 %v461, %v584
        %v586 = vpop.f32.mrb[0].mxu0
        %587 = vmatprep.mubr.f32.mxu0 0.0
        %588 = vmatmul.mubr.f32.gmra.mrb[0].mxu0 %v486
        %v589 = vpop.f32.mrb[0].mxu0
        %v590 = vadd.f32 %v462, %v589
        %v591 = vpop.f32.mrb[0].mxu0
        %592 = vdwg.mxu0
        %v593 = vsub.f32 0.0, %v555
        %v594 = vsub.f32 0.0, %v560
        %v595 = vsub.f32 0.0, %v565
        %v596 = vsub.f32 0.0, %v570
        %v597 = vsub.f32 0.0, %v575
        %v598 = vsub.f32 0.0, %v580
        %v599 = vsub.f32 0.0, %v585
        %v600 = vsub.f32 0.0, %v590
        %v601 = vmul.f32 %v593, 1.442695
        %v602 = vpow.pop %v601
        %v603 = vmul.f32 %v594, 1.442695
        %v604 = vpow.pop %v603
        %v605 = vmul.f32 %v595, 1.442695
        %v606 = vpow.pop %v605
        %v607 = vmul.f32 %v596, 1.442695
        %v608 = vpow.pop %v607
        %v609 = vmul.f32 %v597, 1.442695
        %v610 = vpow.pop %v609
        %v611 = vmul.f32 %v598, 1.442695
        %v612 = vpow.pop %v611
        %v613 = vmul.f32 %v599, 1.442695
        %v614 = vpow.pop %v613
        %v615 = vmul.f32 %v600, 1.442695
        %v616 = vpow.pop %v615
        %v617 = vadd.f32 %v602, 1.0
        %v618 = vadd.f32 %v604, 1.0
        %v619 = vadd.f32 %v606, 1.0
        %v620 = vadd.f32 %v608, 1.0
        %v621 = vadd.f32 %v610, 1.0
        %v622 = vadd.f32 %v612, 1.0
        %v623 = vadd.f32 %v614, 1.0
        %v624 = vadd.f32 %v616, 1.0
        %v625 = vrcp.pop %v617
        %v626 = vmul.f32 1.0, %v625
        %v627 = vrcp.pop %v618
        %v628 = vmul.f32 1.0, %v627
        %v629 = vrcp.pop %v619
        %v630 = vmul.f32 1.0, %v629
        %v631 = vrcp.pop %v620
        %v632 = vmul.f32 1.0, %v631
        %v633 = vrcp.pop %v621
        %v634 = vmul.f32 1.0, %v633
        %v635 = vrcp.pop %v622
        %v636 = vmul.f32 1.0, %v635
        %v637 = vrcp.pop %v623
        %v638 = vmul.f32 1.0, %v637
        %v639 = vrcp.pop %v624
        %v640 = vmul.f32 1.0, %v639
        %vm641 = vcmask 7168
        %642 = vst.msk [vmem:[%s252] sm:$0xff] %vm641, %v626
        %643 = vst.msk [vmem:[%s252 + $0x8] sm:$0xff] %vm641, %v628
        %644 = vst.msk [vmem:[%s252 + $0x10] sm:$0xff] %vm641, %v630
        %645 = vst.msk [vmem:[%s252 + $0x18] sm:$0xff] %vm641, %v632
        %646 = vst.msk [vmem:[%s252 + $0x20] sm:$0xff] %vm641, %v634
        %647 = vst.msk [vmem:[%s252 + $0x28] sm:$0xff] %vm641, %v636
        %648 = vst.msk [vmem:[%s252 + $0x30] sm:$0xff] %vm641, %v638
        %649 = vst.msk [vmem:[%s252 + $0x38] sm:$0xff] %vm641, %v640
      $region55: #{gap_forward.1} parent=39 // pred_fallthru
        _
      %p650 = scmp.lt.s32.totalorder %s20, 1
      %s651 = scalar_select %p650, %s20, 1
      %s652 = smul.addr %s651, 8
      %s653 = smul.addr %s652, 8
      %s654 = scalar_lea.vmem %s5, %s653
      // Predicated region
      $region56: #{gap_forward.1} parent=39 // pred_check
        %p655 = pneg %p158
      $region57: #{gap_forward.1} parent=39 // pred_check_branch
        %657 = sbr.rel (%p655) target = $region59
      $region58: #{gap_forward.1} parent=39 // pred_region
        _
      $region59: #{gap_forward.1} parent=39 // pred_fallthru
        _
    $region40: #{gap_forward.1} parent=5 // pred_fallthru
      _
    %p658 = scmp.le.s32.totalorder 2, %s11
    // Predicated region
    $region60: #{gap_forward.1} parent=5 // pred_check
      %p659 = pneg %p658
    $region61: #{gap_forward.1} parent=5 // pred_check_branch
      %661 = sbr.rel (%p659) target = $region63
    $region62: #{gap_forward.1} parent=5 // pred_region
      %s662 = ssub.s32 %s11, 2
      // Predicated region
      $region64: #{gap_forward.1} parent=62 // pred_check
        %p663 = pneg %p164
      $region65: #{gap_forward.1} parent=62 // pred_check_branch
        %665 = sbr.rel (%p663) target = $region67
      $region66: #{gap_forward.1} parent=62 // pred_region
        %p666 = scmp.lt.s32.totalorder %s22, 1
        %s667 = scalar_select %p666, %s22, 1
        %s668 = smul.addr %s667, 8
        %s669 = smul.addr %s668, 8
        %s670 = scalar_lea.vmem %s5, %s669
      $region67: #{gap_forward.1} parent=62 // pred_fallthru
        _
    $region63: #{gap_forward.1} parent=5 // pred_fallthru
      _
  $region6: #{gap_forward.1} parent=0 // loop_footer
    %s15 = sadd.s32 1, %s11
  $region7: #{gap_forward.1} parent=0 // loop_footer_branch
    %10 = sbr.rel target = $region3
  $region8: #{gap_forward.1} parent=0 // loop_exit
    _

</llo_original>
